<compile_context>
chip_gen: v7x
topology: tpu7x:2x2x1
jax: 0.10.0
libtpu: 0.0.40
codegen_flags: <defaults>
</compile_context>

<pallas_src>
import jax
import jax.numpy as jnp
from jax.experimental import pallas as pl
from jax.experimental.pallas import tpu as pltpu

_LANE = 128
_SUBLANE = 8


def _round_up(n: int, m: int) -> int:
    return ((n + m - 1) // m) * m


# --------------------------------------------------------------------------
# Kernel
# --------------------------------------------------------------------------
def chatbot_mlp_kernel(x_ref, w1_ref, b1_ref, w2_ref, b2_ref, o_ref):
    # fc1: (TB, I) @ (I, Hp) -> f32 accumulate on MXU.
    h = jnp.dot(x_ref[...], w1_ref[...], preferred_element_type=jnp.float32)
    # bias + ReLU in f32 (padded hidden lanes stay exactly 0: zero w1 cols / b1).
    h = jnp.maximum(h + b1_ref[...], 0.0)
    # Dropout(p=0.2) -> identity at inference.
    # fc2: (TB, Hp) @ (Hp, O) -> f32 accumulate; cast h to the weight dtype
    # (no-op for f32 params, bf16 for the low-precision path).
    out = jnp.dot(h.astype(w2_ref.dtype), w2_ref[...],
                  preferred_element_type=jnp.float32)
    o_ref[...] = (out + b2_ref[...]).astype(o_ref.dtype)


# --------------------------------------------------------------------------
# One-time parameter preparation (model-load time, NOT per forward call).
# --------------------------------------------------------------------------
def prepare_params(w1, b1, w2, b2, *, param_dtype=jnp.float32):
    """w1: (I, H); b1: (H,) or (1, H); w2: (H, O); b2: (O,) or (1, O).

    Pads only the hidden dim up to a multiple of 128 (lane-dense intermediate,
    full MXU tile for the fc2 contraction). Input and output feature dims are
    left unpadded. Returns (w1p, b1p, w2p, b2p).
    """
    hidden = w1.shape[1]
    hp = _round_up(hidden, _LANE)
    w1p = jnp.pad(w1, ((0, 0), (0, hp - hidden))).astype(param_dtype)
    b1p = jnp.pad(jnp.reshape(b1, (1, -1)), ((0, 0), (0, hp - hidden))).astype(jnp.float32)
    w2p = jnp.pad(w2, ((0, hp - hidden), (0, 0))).astype(param_dtype)
    b2p = jnp.reshape(b2, (1, -1)).astype(jnp.float32)
    return w1p, b1p, w2p, b2p


def _pick_block_batch(batch: int) -> int:
    rb = _round_up(batch, _SUBLANE)
    if rb <= 512:
        # Small batch: one (or few) tiles; per-step overhead dominates anyway.
        return min(rb, 512)
    # Large batch: aim for >= 8 grid steps (v7x has 2 TCs; "parallel" axis is
    # sharded across them) while keeping tiles >= 512 rows and <= 2048 rows.
    return min(2048, max(512, _round_up(pl.cdiv(batch, 8), _SUBLANE)))


def _vmem_budget_bytes(block_batch, in_f, hp, out_f, x_itemsize, w_itemsize):
    x_tiles = 2 * block_batch * in_f * x_itemsize          # double-buffered input
    o_tiles = 2 * block_batch * out_f * 4                  # double-buffered output (f32)
    weights = (in_f * hp + hp * out_f) * w_itemsize + (hp + out_f) * 4
    inter = block_batch * hp * 4                            # h intermediate (f32)
    return x_tiles + o_tiles + weights + inter


# --------------------------------------------------------------------------
# Forward wrapper
# --------------------------------------------------------------------------
def chatbot_forward(x, w1p, b1p, w2p, b2p, *, block_batch=None,
                    activation_dtype=None):
    """x: (B, I). w*p/b*p: outputs of prepare_params. Returns (B, O) f32."""
    batch, in_features = x.shape
    hp = w1p.shape[1]
    out_features = w2p.shape[1]

    if activation_dtype is not None and x.dtype != activation_dtype:
        x = x.astype(activation_dtype)

    if block_batch is None:
        block_batch = _pick_block_batch(batch)
    bp = _round_up(batch, block_batch)
    if bp != batch:
        # Only the batch dim is ever padded (no-op when batch % block_batch == 0).
        x = jnp.pad(x, ((0, bp - batch), (0, 0)))

    grid = (bp // block_batch,)

    budget = _vmem_budget_bytes(block_batch, in_features, hp, out_features,
                                jnp.dtype(x.dtype).itemsize,
                                jnp.dtype(w1p.dtype).itemsize)
    vmem_limit = int(min(64 * 1024 * 1024, max(32 * 1024 * 1024, 2 * budget)))

    out = pl.pallas_call(
        chatbot_mlp_kernel,
        out_shape=jax.ShapeDtypeStruct((bp, out_features), jnp.float32),
        grid_spec=pl.GridSpec(
            grid=grid,
            in_specs=[
                # Activations stream per grid step; last dim = full array dim
                # (unpadded, lane count = in_features).
                pl.BlockSpec((block_batch, in_features), lambda i: (i, 0)),
                # Weights / biases stay VMEM-resident (same block every step).
                pl.BlockSpec((in_features, hp), lambda i: (0, 0)),
                pl.BlockSpec((1, hp), lambda i: (0, 0)),
                pl.BlockSpec((hp, out_features), lambda i: (0, 0)),
                pl.BlockSpec((1, out_features), lambda i: (0, 0)),
            ],
            # Unpadded output: full-dim last block (masked store, ~21x fewer bytes
            # than padding O=6 to 128, and no post-kernel lane slice).
            out_specs=pl.BlockSpec((block_batch, out_features), lambda i: (i, 0)),
        ),
        compiler_params=pltpu.CompilerParams(
            # Batch axis is independent -> shard across TCs on v7x megacore.
            dimension_semantics=("parallel",),
            vmem_limit_bytes=vmem_limit,
        ),
    )(x, w1p, b1p, w2p, b2p)

    return out[:batch] if bp != batch else out


def reference_forward(x, w1, b1, w2, b2):
    h = jnp.maximum(x @ w1 + b1, 0.0)
    return h @ w2 + b2


if __name__ == "__main__":
    # Small synthetic sizes consistent with the module (hidden_size=10,
    # bag-of-words input, small classification output).
    batch = 16
    input_size = 32
    hidden_size = 10
    output_size = 6

    key = jax.random.PRNGKey(0)
    kx, kw1, kb1, kw2, kb2 = jax.random.split(key, 5)

    x = jax.random.normal(kx, (batch, input_size), dtype=jnp.float32)

    # Deterministic init matching nn.Linear's U(-1/sqrt(fan_in), 1/sqrt(fan_in)),
    # stored pre-transposed as (in_features, out_features).
    lim1 = 1.0 / jnp.sqrt(jnp.float32(input_size))
    lim2 = 1.0 / jnp.sqrt(jnp.float32(hidden_size))
    w1 = jax.random.uniform(kw1, (input_size, hidden_size), jnp.float32, -lim1, lim1)
    b1 = jax.random.uniform(kb1, (1, hidden_size), jnp.float32, -lim1, lim1)
    w2 = jax.random.uniform(kw2, (hidden_size, output_size), jnp.float32, -lim2, lim2)
    b2 = jax.random.uniform(kb2, (1, output_size), jnp.float32, -lim2, lim2)

    ref = reference_forward(x, w1, b1, w2, b2)

    # --- f32 path (tight correctness check) ---
    params_f32 = prepare_params(w1, b1, w2, b2, param_dtype=jnp.float32)
    out = jax.block_until_ready(chatbot_forward(x, *params_f32))
    assert out.shape == (batch, output_size)
    assert jnp.allclose(out, ref, atol=1e-5, rtol=1e-5), "f32 mismatch vs reference"

    # --- bf16 activations/weights path (memory-bound production config) ---
    params_bf16 = prepare_params(w1, b1, w2, b2, param_dtype=jnp.bfloat16)
    out_bf16 = jax.block_until_ready(
        chatbot_forward(x, *params_bf16, activation_dtype=jnp.bfloat16))
    assert out_bf16.shape == (batch, output_size)
    assert jnp.allclose(out_bf16, ref, atol=1e-1, rtol=1e-1), "bf16 mismatch vs reference"

    print("KERNEL_OK")
</pallas_src>

<mosaic_0001>
module attributes {stable_mosaic.version = 11 : i64} {
  func.func @chatbot_mlp_kernel(%arg0: i32, %arg1: memref<16x32xf32, #tpu.memory_space<vmem>>, %arg2: memref<32x128xf32, #tpu.memory_space<vmem>>, %arg3: memref<1x128xf32, #tpu.memory_space<vmem>>, %arg4: memref<128x6xf32, #tpu.memory_space<vmem>>, %arg5: memref<1x6xf32, #tpu.memory_space<vmem>>, %arg6: memref<16x6xf32, #tpu.memory_space<vmem>>) attributes {dimension_semantics = [#tpu.dimension_semantics<parallel>], iteration_bounds = array<i64: 1>, scalar_prefetch = 0 : i64, scratch_operands = 0 : i64, tpu.core_type = #tpu.core_type<tc>, window_params = [{transform_indices = @transform_0, window_bounds = array<i64: 16, 32>}, {pipeline_mode = #tpu.pipeline_mode<synchronous>, transform_indices = @transform_1, window_bounds = array<i64: 32, 128>}, {pipeline_mode = #tpu.pipeline_mode<synchronous>, transform_indices = @transform_2, window_bounds = array<i64: 1, 128>}, {pipeline_mode = #tpu.pipeline_mode<synchronous>, transform_indices = @transform_3, window_bounds = array<i64: 128, 6>}, {pipeline_mode = #tpu.pipeline_mode<synchronous>, transform_indices = @transform_4, window_bounds = array<i64: 1, 6>}, {transform_indices = @transform_5, window_bounds = array<i64: 16, 6>}]} {
    %c0 = arith.constant 0 : index
    %c0_0 = arith.constant 0 : index
    %0 = vector.load %arg1[%c0, %c0_0] : memref<16x32xf32, #tpu.memory_space<vmem>>, vector<16x32xf32>
    %c0_1 = arith.constant 0 : index
    %c0_2 = arith.constant 0 : index
    %1 = vector.load %arg2[%c0_1, %c0_2] : memref<32x128xf32, #tpu.memory_space<vmem>>, vector<32x128xf32>
    %cst = arith.constant dense<0.000000e+00> : vector<16x128xf32>
    %2 = tpu.matmul %0, %1, %cst {dimension_numbers = #tpu.dot_dimension_numbers<[1], [0], [0], [1], [0, 0, 1, 1], [], []>} : vector<16x32xf32>, vector<32x128xf32>, vector<16x128xf32> -> vector<16x128xf32>
    %c0_3 = arith.constant 0 : index
    %c0_4 = arith.constant 0 : index
    %3 = vector.load %arg3[%c0_3, %c0_4] : memref<1x128xf32, #tpu.memory_space<vmem>>, vector<1x128xf32>
    %4 = vector.broadcast %3 : vector<1x128xf32> to vector<16x128xf32>
    %5 = arith.addf %2, %4 : vector<16x128xf32>
    %cst_5 = arith.constant 0.000000e+00 : f32
    %6 = vector.broadcast %cst_5 : f32 to vector<16x128xf32>
    %7 = arith.maximumf %5, %6 : vector<16x128xf32>
    %c0_6 = arith.constant 0 : index
    %c0_7 = arith.constant 0 : index
    %8 = vector.load %arg4[%c0_6, %c0_7] : memref<128x6xf32, #tpu.memory_space<vmem>>, vector<128x6xf32>
    %cst_8 = arith.constant dense<0.000000e+00> : vector<16x6xf32>
    %9 = tpu.matmul %7, %8, %cst_8 {dimension_numbers = #tpu.dot_dimension_numbers<[1], [0], [0], [1], [0, 0, 1, 1], [], []>} : vector<16x128xf32>, vector<128x6xf32>, vector<16x6xf32> -> vector<16x6xf32>
    %c0_9 = arith.constant 0 : index
    %c0_10 = arith.constant 0 : index
    %10 = vector.load %arg5[%c0_9, %c0_10] : memref<1x6xf32, #tpu.memory_space<vmem>>, vector<1x6xf32>
    %11 = vector.broadcast %10 : vector<1x6xf32> to vector<16x6xf32>
    %12 = arith.addf %9, %11 : vector<16x6xf32>
    %c0_11 = arith.constant 0 : index
    %c0_12 = arith.constant 0 : index
    %13 = vector.load %arg6[%c0_11, %c0_12] : memref<16x6xf32, #tpu.memory_space<vmem>>, vector<16x6xf32>
    tpu.vector_store %arg6[%c0_11, %c0_12], %12 {strides = array<i32>} : memref<16x6xf32, #tpu.memory_space<vmem>>, vector<16x6xf32>,
    return
  }
  func.func @transform_0(%arg0: i32) -> (i32, i32) {
    %c0_i32 = arith.constant 0 : i32
    %c0_i32_0 = arith.constant 0 : i32
    return %arg0, %c0_i32 : i32, i32
  }
  func.func @transform_1(%arg0: i32) -> (i32, i32) {
    %c0_i32 = arith.constant 0 : i32
    %c0_i32_0 = arith.constant 0 : i32
    %c0_i32_1 = arith.constant 0 : i32
    return %c0_i32, %c0_i32_0 : i32, i32
  }
  func.func @transform_2(%arg0: i32) -> (i32, i32) {
    %c0_i32 = arith.constant 0 : i32
    %c0_i32_0 = arith.constant 0 : i32
    %c0_i32_1 = arith.constant 0 : i32
    return %c0_i32, %c0_i32_0 : i32, i32
  }
  func.func @transform_3(%arg0: i32) -> (i32, i32) {
    %c0_i32 = arith.constant 0 : i32
    %c0_i32_0 = arith.constant 0 : i32
    %c0_i32_1 = arith.constant 0 : i32
    return %c0_i32, %c0_i32_0 : i32, i32
  }
  func.func @transform_4(%arg0: i32) -> (i32, i32) {
    %c0_i32 = arith.constant 0 : i32
    %c0_i32_0 = arith.constant 0 : i32
    %c0_i32_1 = arith.constant 0 : i32
    return %c0_i32, %c0_i32_0 : i32, i32
  }
  func.func @transform_5(%arg0: i32) -> (i32, i32) {
    %c0_i32 = arith.constant 0 : i32
    %c0_i32_0 = arith.constant 0 : i32
    return %arg0, %c0_i32 : i32, i32
  }
}

</mosaic_0001>

<llo_original>
// kernel: tpu_custom_call.1
$region0: #{tpu_custom_call.1}
  #allocation0 [shape = 'u32[]', space=smem, size = 0x4, offset = 0x4, fixed_abs, tag = 'smem constant byte address 0x4 - core index']
  #allocation1 [shape = 'u32[144,128]{1,0:T(1,128)}', space=vmem, size = 0x12000, scoped, tag = 'internal scratch']
  %s0 = inlined_call_operand.vmem [shape: f32[16,32], index: 0, kind: input, shape index: {}]
  %s1 = inlined_call_operand.vmem [shape: f32[32,128], index: 1, kind: input, shape index: {}]
  %s2 = inlined_call_operand.vmem [shape: f32[1,128], index: 2, kind: input, shape index: {}]
  %s3 = inlined_call_operand.vmem [shape: f32[128,6], index: 3, kind: input, shape index: {}]
  %s4 = inlined_call_operand.vmem [shape: f32[1,6], index: 4, kind: input, shape index: {}]
  %s5 = inlined_call_operand.vmem [shape: f32[16,6], index: 5, kind: output, shape index: {}]
  %s6 = sld [smem:[#allocation0]]
  $region30: #{tpu_custom_call.1} parent=0
    _
  %s8 = ssub.s32 1, %s6
  %s9 = scalar_select 0, %s8, %s6
  // Predicated region
  $region2: #{tpu_custom_call.1} parent=0 // pred_check
    _
  $region3: #{tpu_custom_call.1} parent=0 // pred_check_branch
    %11 = sbr.rel (0) target = $region5
  $region4: #{tpu_custom_call.1} parent=0 // pred_region
    _
  $region5: #{tpu_custom_call.1} parent=0 // pred_fallthru
    _
  // Predicated region
  $region6: #{tpu_custom_call.1} parent=0 // pred_check
    _
  $region7: #{tpu_custom_call.1} parent=0 // pred_check_branch
    %13 = sbr.rel (0) target = $region9
  $region8: #{tpu_custom_call.1} parent=0 // pred_region
    _
  $region9: #{tpu_custom_call.1} parent=0 // pred_fallthru
    _
  // Predicated region
  $region10: #{tpu_custom_call.1} parent=0 // pred_check
    _
  $region11: #{tpu_custom_call.1} parent=0 // pred_check_branch
    %15 = sbr.rel (0) target = $region13
  $region12: #{tpu_custom_call.1} parent=0 // pred_region
    _
  $region13: #{tpu_custom_call.1} parent=0 // pred_fallthru
    _
  // Predicated region
  $region14: #{tpu_custom_call.1} parent=0 // pred_check
    _
  $region15: #{tpu_custom_call.1} parent=0 // pred_check_branch
    %17 = sbr.rel (0) target = $region17
  $region16: #{tpu_custom_call.1} parent=0 // pred_region
    _
  $region17: #{tpu_custom_call.1} parent=0 // pred_fallthru
    _
  // Predicated region
  $region18: #{tpu_custom_call.1} parent=0 // pred_check
    _
  $region19: #{tpu_custom_call.1} parent=0 // pred_check_branch
    %19 = sbr.rel (0) target = $region21
  $region20: #{tpu_custom_call.1} parent=0 // pred_region
    _
  $region21: #{tpu_custom_call.1} parent=0 // pred_fallthru
    _
  %v20 = vld [vmem:[%s0] sm:$0xff]
  %v21 = vld [vmem:[%s0 + $0x8] sm:$0xff]
  %v22 = vld [vmem:[%s1] sm:$0xff]
  %v23 = vld [vmem:[%s1 + $0x8] sm:$0xff]
  %v24 = vld [vmem:[%s1 + $0x10] sm:$0xff]
  %v25 = vld [vmem:[%s1 + $0x18] sm:$0xff]
  %v26 = vld [vmem:[%s2] sm:$0x1]
  %v28 = vlaneseq
  %v29 = vshrl.u32 %v28, 7
  %v30 = vsub.s32 0, %v29
  %v31 = vrot.slane %v26, %v30
  %vm33 = vcmask 261120
  %v35 = vsel %vm33, %v20, 0
  %v38 = vsel %vm33, %v21, 0
  %40 = vmatprep.subr.mxu0 0.0
  %41 = vmatpush1.msra.mxu0 %v22
  %42 = vmatprep.subr.mxu0 0.0
  %43 = vmatpush1.msra.mxu0 %v23
  %44 = vmatprep.subr.mxu0 0.0
  %45 = vmatpush1.msra.mxu0 %v24
  %46 = vmatprep.subr.mxu0 0.0
  %47 = vmatpush1.msra.mxu0 %v25
  %48 = vmatprep.subr.mxu0 0.0
  %49 = vmatpush1.msra.mxu0 0.0
  %50 = vmatprep.subr.mxu0 0.0
  %51 = vmatpush1.msra.mxu0 0.0
  %52 = vmatprep.subr.mxu0 0.0
  %53 = vmatpush1.msra.mxu0 0.0
  %54 = vmatprep.subr.mxu0 0.0
  %55 = vmatpush1.msra.mxu0 0.0
  %56 = vmatprep.subr.mxu0 0.0
  %57 = vmatpush1.msra.mxu0 0.0
  %58 = vmatprep.subr.mxu0 0.0
  %59 = vmatpush1.msra.mxu0 0.0
  %60 = vmatprep.subr.mxu0 0.0
  %61 = vmatpush1.msra.mxu0 0.0
  %62 = vmatprep.subr.mxu0 0.0
  %63 = vmatpush1.msra.mxu0 0.0
  %64 = vmatprep.subr.mxu0 0.0
  %65 = vmatpush1.msra.mxu0 0.0
  %66 = vmatprep.subr.mxu0 0.0
  %67 = vmatpush1.msra.mxu0 0.0
  %68 = vmatprep.subr.mxu0 0.0
  %69 = vmatpush1.msra.mxu0 0.0
  %70 = vmatprep.subr.mxu0 0.0
  %71 = vmatpush1.msra.mxu0 0.0
  %72 = vmatprep.subr.mxu0 0.0
  %73 = vmatpush1.msra.mxu0 0.0
  %74 = vmatprep.subr.mxu0 0.0
  %75 = vmatpush1.msra.mxu0 0.0
  %76 = vmatprep.subr.mxu0 0.0
  %77 = vmatpush1.msra.mxu0 0.0
  %78 = vmatprep.subr.mxu0 0.0
  %79 = vmatpush1.msra.mxu0 0.0
  %80 = vmatprep.subr.mxu0 0.0
  %81 = vmatpush1.msra.mxu0 0.0
  %82 = vmatprep.subr.mxu0 0.0
  %83 = vmatpush1.msra.mxu0 0.0
  %84 = vmatprep.subr.mxu0 0.0
  %85 = vmatpush1.msra.mxu0 0.0
  %86 = vmatprep.subr.mxu0 0.0
  %87 = vmatpush1.msra.mxu0 0.0
  %88 = vmatprep.subr.mxu0 0.0
  %89 = vmatpush1.msra.mxu0 0.0
  %90 = vmatprep.subr.mxu0 0.0
  %91 = vmatpush1.msra.mxu0 0.0
  %92 = vmatprep.subr.mxu0 0.0
  %93 = vmatpush1.msra.mxu0 0.0
  %94 = vmatprep.subr.mxu0 0.0
  %95 = vmatpush1.msra.mxu0 0.0
  %96 = vmatprep.subr.mxu0 0.0
  %97 = vmatpush1.msra.mxu0 0.0
  %98 = vmatprep.subr.mxu0 0.0
  %99 = vmatpush1.msra.mxu0 0.0
  %100 = vmatprep.subr.mxu0 0.0
  %101 = vmatpush1.msra.mxu0 0.0
  %102 = vmatprep.subr.mxu0 0.0
  %103 = vmatpush1.msra.mxu0 0.0
  %104 = vmatprep.mubr.f32.mxu0 0.0
  %105 = vmatmul.mubr.f32.gmra.mrb[0].mxu0 %v35
  %v106 = vpop.f32.mrb[0].mxu0
  %v107 = vadd.f32 %v31, %v106
  %v108 = vpop.f32.mrb[0].mxu0
  %109 = vmatprep.mubr.f32.mxu0 0.0
  %110 = vmatmul.mubr.f32.gmra.mrb[0].mxu0 %v38
  %v111 = vpop.f32.mrb[0].mxu0
  %v112 = vadd.f32 %v31, %v111
  %v113 = vpop.f32.mrb[0].mxu0
  %114 = vdwg.mxu0
  %v115 = vmax.f32 %v107, 0.0
  %v116 = vmax.f32 %v112, 0.0
  %v117 = vld [vmem:[%s3] sm:$0xff]
  %v118 = vld [vmem:[%s3 + $0x8] sm:$0xff]
  %v119 = vld [vmem:[%s3 + $0x10] sm:$0xff]
  %v120 = vld [vmem:[%s3 + $0x18] sm:$0xff]
  %v121 = vld [vmem:[%s3 + $0x20] sm:$0xff]
  %v122 = vld [vmem:[%s3 + $0x28] sm:$0xff]
  %v123 = vld [vmem:[%s3 + $0x30] sm:$0xff]
  %v124 = vld [vmem:[%s3 + $0x38] sm:$0xff]
  %v125 = vld [vmem:[%s3 + $0x40] sm:$0xff]
  %v126 = vld [vmem:[%s3 + $0x48] sm:$0xff]
  %v127 = vld [vmem:[%s3 + $0x50] sm:$0xff]
  %v128 = vld [vmem:[%s3 + $0x58] sm:$0xff]
  %v129 = vld [vmem:[%s3 + $0x60] sm:$0xff]
  %v130 = vld [vmem:[%s3 + $0x68] sm:$0xff]
  %v131 = vld [vmem:[%s3 + $0x70] sm:$0xff]
  %v132 = vld [vmem:[%s3 + $0x78] sm:$0xff]
  %v133 = vld [vmem:[%s4] sm:$0x1]
  %v135 = vlaneseq
  %v136 = vshrl.u32 %v135, 7
  %v137 = vsub.s32 0, %v136
  %v138 = vrot.slane %v133, %v137
  %140 = vmatprep.subr.mxu0 0.0
  %141 = vmatpush1.msra.mxu0 %v117
  %142 = vmatprep.subr.mxu0 0.0
  %143 = vmatpush1.msra.mxu0 %v118
  %144 = vmatprep.subr.mxu0 0.0
  %145 = vmatpush1.msra.mxu0 %v119
  %146 = vmatprep.subr.mxu0 0.0
  %147 = vmatpush1.msra.mxu0 %v120
  %148 = vmatprep.subr.mxu0 0.0
  %149 = vmatpush1.msra.mxu0 %v121
  %150 = vmatprep.subr.mxu0 0.0
  %151 = vmatpush1.msra.mxu0 %v122
  %152 = vmatprep.subr.mxu0 0.0
  %153 = vmatpush1.msra.mxu0 %v123
  %154 = vmatprep.subr.mxu0 0.0
  %155 = vmatpush1.msra.mxu0 %v124
  %156 = vmatprep.subr.mxu0 0.0
  %157 = vmatpush1.msra.mxu0 %v125
  %158 = vmatprep.subr.mxu0 0.0
  %159 = vmatpush1.msra.mxu0 %v126
  %160 = vmatprep.subr.mxu0 0.0
  %161 = vmatpush1.msra.mxu0 %v127
  %162 = vmatprep.subr.mxu0 0.0
  %163 = vmatpush1.msra.mxu0 %v128
  %164 = vmatprep.subr.mxu0 0.0
  %165 = vmatpush1.msra.mxu0 %v129
  %166 = vmatprep.subr.mxu0 0.0
  %167 = vmatpush1.msra.mxu0 %v130
  %168 = vmatprep.subr.mxu0 0.0
  %169 = vmatpush1.msra.mxu0 %v131
  %170 = vmatprep.subr.mxu0 0.0
  %171 = vmatpush1.msra.mxu0 %v132
  %172 = vmatprep.subr.mxu0 0.0
  %173 = vmatpush1.msra.mxu0 0.0
  %174 = vmatprep.subr.mxu0 0.0
  %175 = vmatpush1.msra.mxu0 0.0
  %176 = vmatprep.subr.mxu0 0.0
  %177 = vmatpush1.msra.mxu0 0.0
  %178 = vmatprep.subr.mxu0 0.0
  %179 = vmatpush1.msra.mxu0 0.0
  %180 = vmatprep.subr.mxu0 0.0
  %181 = vmatpush1.msra.mxu0 0.0
  %182 = vmatprep.subr.mxu0 0.0
  %183 = vmatpush1.msra.mxu0 0.0
  %184 = vmatprep.subr.mxu0 0.0
  %185 = vmatpush1.msra.mxu0 0.0
  %186 = vmatprep.subr.mxu0 0.0
  %187 = vmatpush1.msra.mxu0 0.0
  %188 = vmatprep.subr.mxu0 0.0
  %189 = vmatpush1.msra.mxu0 0.0
  %190 = vmatprep.subr.mxu0 0.0
  %191 = vmatpush1.msra.mxu0 0.0
  %192 = vmatprep.subr.mxu0 0.0
  %193 = vmatpush1.msra.mxu0 0.0
  %194 = vmatprep.subr.mxu0 0.0
  %195 = vmatpush1.msra.mxu0 0.0
  %196 = vmatprep.subr.mxu0 0.0
  %197 = vmatpush1.msra.mxu0 0.0
  %198 = vmatprep.subr.mxu0 0.0
  %199 = vmatpush1.msra.mxu0 0.0
  %200 = vmatprep.subr.mxu0 0.0
  %201 = vmatpush1.msra.mxu0 0.0
  %202 = vmatprep.subr.mxu0 0.0
  %203 = vmatpush1.msra.mxu0 0.0
  %204 = vmatprep.mubr.f32.mxu0 0.0
  %205 = vmatmul.mubr.f32.gmra.mrb[0].mxu0 %v115
  %v206 = vpop.f32.mrb[0].mxu0
  %v207 = vadd.f32 %v138, %v206
  %v208 = vpop.f32.mrb[0].mxu0
  %209 = vmatprep.mubr.f32.mxu0 0.0
  %210 = vmatmul.mubr.f32.gmra.mrb[0].mxu0 %v116
  %v211 = vpop.f32.mrb[0].mxu0
  %v212 = vadd.f32 %v138, %v211
  %v213 = vpop.f32.mrb[0].mxu0
  %214 = vdwg.mxu0
  %vm215 = vcmask 48128
  %216 = vst.msk [vmem:[%s5] sm:$0xff] %vm215, %v207
  %217 = vst.msk [vmem:[%s5 + $0x8] sm:$0xff] %vm215, %v212
  // Predicated region
  $region22: #{tpu_custom_call.1} parent=0 // pred_check
    _
  $region23: #{tpu_custom_call.1} parent=0 // pred_check_branch
    %219 = sbr.rel (0) target = $region25
  $region24: #{tpu_custom_call.1} parent=0 // pred_region
    _
  $region25: #{tpu_custom_call.1} parent=0 // pred_fallthru
    _
  // Predicated region
  $region26: #{tpu_custom_call.1} parent=0 // pred_check
    _
  $region27: #{tpu_custom_call.1} parent=0 // pred_check_branch
    %221 = sbr.rel (0) target = $region29
  $region28: #{tpu_custom_call.1} parent=0 // pred_region
    _
  $region29: #{tpu_custom_call.1} parent=0 // pred_fallthru
    _

</llo_original>
